<compile_context>
chip_gen: v7x
topology: tpu7x:2x2x1
jax: 0.10.0
libtpu: 0.0.40
codegen_flags: <defaults>
</compile_context>

<pallas_src>
import jax
import jax.numpy as jnp
from jax.experimental import pallas as pl
from jax.experimental.pallas import tpu as pltpu


def _round_up(x, m):
    return (x + m - 1) // m * m


def cbow_kernel(emb_ref, len_ref,
                w1_ref, b1_ref,
                w2_ref, b2_ref,
                wo_ref, bo_ref,
                out_ref):
    # emb_ref : (TB, S, E)  embeddings for this batch tile (streamed)
    # len_ref : (TB, 1)     f32 token counts (attention_mask.sum(1))
    # w*/b*   : resident weight / bias blocks (same block every grid step)
    # out_ref : (TB, Cp)    lane-dense (Cp multiple of 128) score slab

    # ---- mean pool over the sequence dim (spec: sum(dim=1) / seq_len) -------
    # Note: per the PyTorch forward, pad embeddings DO contribute to the sum;
    # the mask is only used for the count, which arrives precomputed.
    pooled = jnp.sum(emb_ref[...].astype(jnp.float32), axis=1)        # (TB, E)
    inv_len = pl.reciprocal(len_ref[...], approx=True)                # EUP slot
    x = jnp.maximum(pooled * inv_len, 0.0)                            # relu

    # ---- hidden layers: x = dropout(relu(m(x))), dropout == identity (eval) -
    # TODO(synk): training-mode dropout (random masking) not implemented.
    b1 = b1_ref[...]                                                  # (1, H1)
    x = jnp.maximum(
        jnp.dot(x.astype(w1_ref.dtype), w1_ref[...],
                preferred_element_type=jnp.float32) + b1, 0.0)

    b2 = b2_ref[...]                                                  # (1, H2)
    x = jnp.maximum(
        jnp.dot(x.astype(w2_ref.dtype), w2_ref[...],
                preferred_element_type=jnp.float32) + b2, 0.0)

    # ---- out_linear (lane-dense padded to Cp) --------------------------------
    out_ref[...] = (
        jnp.dot(x.astype(wo_ref.dtype), wo_ref[...],
                preferred_element_type=jnp.float32) + bo_ref[...]
    )


def cbow_classifier_forward(batch_embeddings, attention_mask,
                            w1, b1, w2, b2, wo, bo,
                            *, batch_tile=128):
    """Forward pass of CBOWClassifier (eval mode).

    batch_embeddings : (B, S, E)   output of the embedding layer
    attention_mask   : (B, S)      1.0 for real tokens, 0.0 for padding
    w1,b1 / w2,b2    : hidden linear params, stored (in, out) / (1, out)
    wo,bo            : output linear params,  stored (in, out) / (1, out)
    """
    B, S, E = batch_embeddings.shape
    H1 = w1.shape[1]
    H2 = w2.shape[1]
    C = wo.shape[1]

    # --- seq_len on the JAX side; the mask itself never enters the kernel ----
    seq_len = attention_mask.astype(jnp.float32).sum(axis=1, keepdims=True)

    # --- lane-dense output: pad num_outs to a multiple of 128 ----------------
    Cp = _round_up(max(C, 128), 128)
    if Cp != C:
        wo = jnp.pad(wo, ((0, 0), (0, Cp - C)))
        bo = jnp.pad(bo, ((0, 0), (0, Cp - C)))

    # --- batch tiling: TB rows per grid step, B padded to a multiple of TB ---
    TB = min(batch_tile, _round_up(B, 8))
    Bp = _round_up(B, TB)
    if Bp != B:
        pad = Bp - B
        batch_embeddings = jnp.pad(batch_embeddings, ((0, pad), (0, 0), (0, 0)))
        # seq_len = 1 on padded rows so the reciprocal stays finite.
        seq_len = jnp.pad(seq_len, ((0, pad), (0, 0)), constant_values=1.0)
    grid = (Bp // TB,)

    in_specs = [
        # Streamed per grid step (double-buffered by the pipeline).
        pl.BlockSpec((TB, S, E), lambda i: (i, 0, 0)),
        pl.BlockSpec((TB, 1), lambda i: (i, 0)),
        # Resident parameters: same block for every grid step -> no re-DMA.
        pl.BlockSpec((E, H1), lambda i: (0, 0)),
        pl.BlockSpec((1, H1), lambda i: (0, 0)),
        pl.BlockSpec((H1, H2), lambda i: (0, 0)),
        pl.BlockSpec((1, H2), lambda i: (0, 0)),
        pl.BlockSpec((H2, Cp), lambda i: (0, 0)),
        pl.BlockSpec((1, Cp), lambda i: (0, 0)),
    ]
    out_specs = pl.BlockSpec((TB, Cp), lambda i: (i, 0))

    scores_padded = pl.pallas_call(
        cbow_kernel,
        out_shape=jax.ShapeDtypeStruct((Bp, Cp), jnp.float32),
        grid=grid,
        in_specs=in_specs,
        out_specs=out_specs,
        compiler_params=pltpu.CompilerParams(
            # Batch tiles are independent -> shard across TensorCores (v7x).
            dimension_semantics=("parallel",),
            # Room for double-buffered (TB, S, E) slabs + resident weights;
            # safe on v5e/v6e (128 MiB) and within v7x's 64 MiB per-TC VMEM.
            vmem_limit_bytes=48 * 1024 * 1024,
        ),
    )(batch_embeddings, seq_len, w1, b1, w2, b2, wo, bo)

    return scores_padded[:B, :C]


if __name__ == "__main__":
    # Small, module-consistent shapes.
    VOCAB = 32
    B, S, E = 8, 16, 128          # batch, seq_len, embedding_dim
    HIDDEN = (128, 128)           # hidden_sizes
    C = 8                         # num_outs
    PAD = 0                       # padding token id

    key = jax.random.PRNGKey(0)
    k_tok, k_emb, k_w1, k_b1, k_w2, k_b2, k_wo, k_bo = jax.random.split(key, 8)

    # Token ids; force some padding at the tail of each sentence.
    tokens = jax.random.randint(k_tok, (B, S), 1, VOCAB)
    pos = jnp.arange(S)[None, :]
    lengths = jnp.array([S, S - 2, S - 5, S, S - 1, S - 7, S - 3, S], jnp.int32)
    tokens = jnp.where(pos < lengths[:, None], tokens, PAD)

    # Embedding table (padding_idx=0 row is zero, like nn.Embedding(padding_idx=0)).
    emb_table = jax.random.normal(k_emb, (VOCAB, E), jnp.float32) * 0.1
    emb_table = emb_table.at[PAD].set(0.0)

    # Embedding layer (glue, plain JAX): (batch_embeddings, attention_mask).
    batch_embeddings = emb_table[tokens]                       # (B, S, E)
    attention_mask = (tokens != PAD).astype(jnp.float32)       # (B, S)

    # Linear params, stored as (in, out); biases as (1, out).
    w1 = jax.random.normal(k_w1, (E, HIDDEN[0]), jnp.float32) * 0.05
    b1 = jax.random.normal(k_b1, (1, HIDDEN[0]), jnp.float32) * 0.01
    w2 = jax.random.normal(k_w2, (HIDDEN[0], HIDDEN[1]), jnp.float32) * 0.05
    b2 = jax.random.normal(k_b2, (1, HIDDEN[1]), jnp.float32) * 0.01
    wo = jax.random.normal(k_wo, (HIDDEN[1], C), jnp.float32) * 0.05
    bo = jax.random.normal(k_bo, (1, C), jnp.float32) * 0.01

    scores = cbow_classifier_forward(batch_embeddings, attention_mask,
                                     w1, b1, w2, b2, wo, bo)
    scores = jax.block_until_ready(scores)

    # Pure-JAX reference (same semantics as the PyTorch forward, eval mode).
    seq_len = attention_mask.sum(axis=1, keepdims=True)
    x = jnp.maximum(batch_embeddings.sum(axis=1) / seq_len, 0.0)
    x = jnp.maximum(x @ w1 + b1, 0.0)
    x = jnp.maximum(x @ w2 + b2, 0.0)
    ref = x @ wo + bo

    assert scores.shape == (B, C)
    # Tolerance accounts for the EUP approximate reciprocal in the mean pool.
    assert jnp.allclose(scores, ref, atol=1e-3, rtol=1e-2), (
        float(jnp.max(jnp.abs(scores - ref))))

    print("KERNEL_OK")
</pallas_src>

<mosaic_0001>
module attributes {stable_mosaic.version = 11 : i64} {
  func.func @cbow_kernel(%arg0: i32, %arg1: memref<8x16x128xf32, #tpu.memory_space<vmem>>, %arg2: memref<8x1xf32, #tpu.memory_space<vmem>>, %arg3: memref<128x128xf32, #tpu.memory_space<vmem>>, %arg4: memref<1x128xf32, #tpu.memory_space<vmem>>, %arg5: memref<128x128xf32, #tpu.memory_space<vmem>>, %arg6: memref<1x128xf32, #tpu.memory_space<vmem>>, %arg7: memref<128x128xf32, #tpu.memory_space<vmem>>, %arg8: memref<1x128xf32, #tpu.memory_space<vmem>>, %arg9: memref<8x128xf32, #tpu.memory_space<vmem>>) attributes {dimension_semantics = [#tpu.dimension_semantics<parallel>], iteration_bounds = array<i64: 1>, scalar_prefetch = 0 : i64, scratch_operands = 0 : i64, tpu.core_type = #tpu.core_type<tc>, window_params = [{transform_indices = @transform_0, window_bounds = array<i64: 8, 16, 128>}, {transform_indices = @transform_1, window_bounds = array<i64: 8, 1>}, {pipeline_mode = #tpu.pipeline_mode<synchronous>, transform_indices = @transform_2, window_bounds = array<i64: 128, 128>}, {pipeline_mode = #tpu.pipeline_mode<synchronous>, transform_indices = @transform_3, window_bounds = array<i64: 1, 128>}, {pipeline_mode = #tpu.pipeline_mode<synchronous>, transform_indices = @transform_4, window_bounds = array<i64: 128, 128>}, {pipeline_mode = #tpu.pipeline_mode<synchronous>, transform_indices = @transform_5, window_bounds = array<i64: 1, 128>}, {pipeline_mode = #tpu.pipeline_mode<synchronous>, transform_indices = @transform_6, window_bounds = array<i64: 128, 128>}, {pipeline_mode = #tpu.pipeline_mode<synchronous>, transform_indices = @transform_7, window_bounds = array<i64: 1, 128>}, {transform_indices = @transform_8, window_bounds = array<i64: 8, 128>}]} {
    %c0 = arith.constant 0 : index
    %c0_0 = arith.constant 0 : index
    %c0_1 = arith.constant 0 : index
    %0 = vector.load %arg1[%c0, %c0_0, %c0_1] : memref<8x16x128xf32, #tpu.memory_space<vmem>>, vector<8x16x128xf32>
    %cst = arith.constant dense<0.000000e+00> : vector<8x128xf32>
    %1 = vector.multi_reduction <add>, %0, %cst [1] : vector<8x16x128xf32> to vector<8x128xf32>
    %c0_2 = arith.constant 0 : index
    %c0_3 = arith.constant 0 : index
    %2 = vector.load %arg2[%c0_2, %c0_3] : memref<8x1xf32, #tpu.memory_space<vmem>>, vector<8x1xf32>
    %3 = tpu.reciprocal %2 {approx = true} : vector<8x1xf32> -> vector<8x1xf32>
    %4 = vector.broadcast %3 : vector<8x1xf32> to vector<8x128xf32>
    %5 = arith.mulf %1, %4 : vector<8x128xf32>
    %cst_4 = arith.constant 0.000000e+00 : f32
    %6 = vector.broadcast %cst_4 : f32 to vector<8x128xf32>
    %7 = arith.maximumf %5, %6 : vector<8x128xf32>
    %c0_5 = arith.constant 0 : index
    %c0_6 = arith.constant 0 : index
    %8 = vector.load %arg4[%c0_5, %c0_6] : memref<1x128xf32, #tpu.memory_space<vmem>>, vector<1x128xf32>
    %c0_7 = arith.constant 0 : index
    %c0_8 = arith.constant 0 : index
    %9 = vector.load %arg3[%c0_7, %c0_8] : memref<128x128xf32, #tpu.memory_space<vmem>>, vector<128x128xf32>
    %cst_9 = arith.constant dense<0.000000e+00> : vector<8x128xf32>
    %10 = tpu.matmul %7, %9, %cst_9 {dimension_numbers = #tpu.dot_dimension_numbers<[1], [0], [0], [1], [0, 0, 1, 1], [], []>} : vector<8x128xf32>, vector<128x128xf32>, vector<8x128xf32> -> vector<8x128xf32>
    %11 = vector.broadcast %8 : vector<1x128xf32> to vector<8x128xf32>
    %12 = arith.addf %10, %11 : vector<8x128xf32>
    %cst_10 = arith.constant 0.000000e+00 : f32
    %13 = vector.broadcast %cst_10 : f32 to vector<8x128xf32>
    %14 = arith.maximumf %12, %13 : vector<8x128xf32>
    %c0_11 = arith.constant 0 : index
    %c0_12 = arith.constant 0 : index
    %15 = vector.load %arg6[%c0_11, %c0_12] : memref<1x128xf32, #tpu.memory_space<vmem>>, vector<1x128xf32>
    %c0_13 = arith.constant 0 : index
    %c0_14 = arith.constant 0 : index
    %16 = vector.load %arg5[%c0_13, %c0_14] : memref<128x128xf32, #tpu.memory_space<vmem>>, vector<128x128xf32>
    %cst_15 = arith.constant dense<0.000000e+00> : vector<8x128xf32>
    %17 = tpu.matmul %14, %16, %cst_15 {dimension_numbers = #tpu.dot_dimension_numbers<[1], [0], [0], [1], [0, 0, 1, 1], [], []>} : vector<8x128xf32>, vector<128x128xf32>, vector<8x128xf32> -> vector<8x128xf32>
    %18 = vector.broadcast %15 : vector<1x128xf32> to vector<8x128xf32>
    %19 = arith.addf %17, %18 : vector<8x128xf32>
    %cst_16 = arith.constant 0.000000e+00 : f32
    %20 = vector.broadcast %cst_16 : f32 to vector<8x128xf32>
    %21 = arith.maximumf %19, %20 : vector<8x128xf32>
    %c0_17 = arith.constant 0 : index
    %c0_18 = arith.constant 0 : index
    %22 = vector.load %arg7[%c0_17, %c0_18] : memref<128x128xf32, #tpu.memory_space<vmem>>, vector<128x128xf32>
    %cst_19 = arith.constant dense<0.000000e+00> : vector<8x128xf32>
    %23 = tpu.matmul %21, %22, %cst_19 {dimension_numbers = #tpu.dot_dimension_numbers<[1], [0], [0], [1], [0, 0, 1, 1], [], []>} : vector<8x128xf32>, vector<128x128xf32>, vector<8x128xf32> -> vector<8x128xf32>
    %c0_20 = arith.constant 0 : index
    %c0_21 = arith.constant 0 : index
    %24 = vector.load %arg8[%c0_20, %c0_21] : memref<1x128xf32, #tpu.memory_space<vmem>>, vector<1x128xf32>
    %25 = vector.broadcast %24 : vector<1x128xf32> to vector<8x128xf32>
    %26 = arith.addf %23, %25 : vector<8x128xf32>
    %c0_22 = arith.constant 0 : index
    %c0_23 = arith.constant 0 : index
    %27 = vector.load %arg9[%c0_22, %c0_23] : memref<8x128xf32, #tpu.memory_space<vmem>>, vector<8x128xf32>
    tpu.vector_store %arg9[%c0_22, %c0_23], %26 {strides = array<i32>} : memref<8x128xf32, #tpu.memory_space<vmem>>, vector<8x128xf32>,
    return
  }
  func.func @transform_0(%arg0: i32) -> (i32, i32, i32) {
    %c0_i32 = arith.constant 0 : i32
    %c0_i32_0 = arith.constant 0 : i32
    %c0_i32_1 = arith.constant 0 : i32
    return %arg0, %c0_i32, %c0_i32_0 : i32, i32, i32
  }
  func.func @transform_1(%arg0: i32) -> (i32, i32) {
    %c0_i32 = arith.constant 0 : i32
    %c0_i32_0 = arith.constant 0 : i32
    return %arg0, %c0_i32 : i32, i32
  }
  func.func @transform_2(%arg0: i32) -> (i32, i32) {
    %c0_i32 = arith.constant 0 : i32
    %c0_i32_0 = arith.constant 0 : i32
    %c0_i32_1 = arith.constant 0 : i32
    return %c0_i32, %c0_i32_0 : i32, i32
  }
  func.func @transform_3(%arg0: i32) -> (i32, i32) {
    %c0_i32 = arith.constant 0 : i32
    %c0_i32_0 = arith.constant 0 : i32
    %c0_i32_1 = arith.constant 0 : i32
    return %c0_i32, %c0_i32_0 : i32, i32
  }
  func.func @transform_4(%arg0: i32) -> (i32, i32) {
    %c0_i32 = arith.constant 0 : i32
    %c0_i32_0 = arith.constant 0 : i32
    %c0_i32_1 = arith.constant 0 : i32
    return %c0_i32, %c0_i32_0 : i32, i32
  }
  func.func @transform_5(%arg0: i32) -> (i32, i32) {
    %c0_i32 = arith.constant 0 : i32
    %c0_i32_0 = arith.constant 0 : i32
    %c0_i32_1 = arith.constant 0 : i32
    return %c0_i32, %c0_i32_0 : i32, i32
  }
  func.func @transform_6(%arg0: i32) -> (i32, i32) {
    %c0_i32 = arith.constant 0 : i32
    %c0_i32_0 = arith.constant 0 : i32
    %c0_i32_1 = arith.constant 0 : i32
    return %c0_i32, %c0_i32_0 : i32, i32
  }
  func.func @transform_7(%arg0: i32) -> (i32, i32) {
    %c0_i32 = arith.constant 0 : i32
    %c0_i32_0 = arith.constant 0 : i32
    %c0_i32_1 = arith.constant 0 : i32
    return %c0_i32, %c0_i32_0 : i32, i32
  }
  func.func @transform_8(%arg0: i32) -> (i32, i32) {
    %c0_i32 = arith.constant 0 : i32
    %c0_i32_0 = arith.constant 0 : i32
    return %arg0, %c0_i32 : i32, i32
  }
}

</mosaic_0001>

<llo_original>
// kernel: tpu_custom_call.1
$region0: #{tpu_custom_call.1}
  #allocation0 [shape = 'u32[]', space=smem, size = 0x4, offset = 0x4, fixed_abs, tag = 'smem constant byte address 0x4 - core index']
  #allocation1 [shape = 'u32[144,128]{1,0:T(1,128)}', space=vmem, size = 0x12000, scoped, tag = 'internal scratch']
  %s0 = inlined_call_operand.hbm [shape: f32[8,16,128], index: 0, kind: input, shape index: {}]
  %s1 = inlined_call_operand.vmem [shape: f32[8,1], index: 1, kind: input, shape index: {}]
  %s2 = inlined_call_operand.hbm [shape: f32[128,128], index: 2, kind: input, shape index: {}]
  %s3 = inlined_call_operand.vmem [shape: f32[1,128], index: 3, kind: input, shape index: {}]
  %s4 = inlined_call_operand.hbm [shape: f32[128,128], index: 4, kind: input, shape index: {}]
  %s5 = inlined_call_operand.vmem [shape: f32[1,128], index: 5, kind: input, shape index: {}]
  %s6 = inlined_call_operand.hbm [shape: f32[128,128], index: 6, kind: input, shape index: {}]
  %s7 = inlined_call_operand.vmem [shape: f32[1,128], index: 7, kind: input, shape index: {}]
  %s8 = inlined_call_operand.hbm [shape: f32[8,128], index: 8, kind: output, shape index: {}]
  %s9 = sld [smem:[#allocation0]]
  $region58: #{tpu_custom_call.1} parent=0
    _
  %s11 = ssub.s32 1, %s9
  %s12 = scalar_select 0, %s11, %s9
  $region1: #{tpu_custom_call.1} parent=0
    #allocation2 [shape = 'u8[65536]{0}', space=vmem, size = 0x10000, scoped, tag = 'input window, operand 0, single buffered']
    #allocation3 [shape = 's32[1]{0}', space=sflag, size = 0x4, scoped, tag = 'scoped memory for tpu_custom_call.1']
    #allocation4 [shape = 's32[1]{0}', space=sflag, size = 0x4, scoped, tag = 'scoped memory for tpu_custom_call.1']
    #allocation5 [shape = 'u8[65536]{0}', space=vmem, size = 0x10000, scoped, tag = 'input window, operand 2, single buffered']
    #allocation6 [shape = 's32[1]{0}', space=sflag, size = 0x4, scoped, tag = 'scoped memory for tpu_custom_call.1']
    #allocation7 [shape = 'u8[65536]{0}', space=vmem, size = 0x10000, scoped, tag = 'input window, operand 4, single buffered']
    #allocation8 [shape = 'u8[65536]{0}', space=vmem, size = 0x10000, scoped, tag = 'input window, operand 6, single buffered']
    #allocation9 [shape = 's32[1]{0}', space=sflag, size = 0x4, scoped, tag = 'scoped memory for tpu_custom_call.1']
    #allocation10 [shape = 'u8[4096]{0}', space=vmem, size = 0x1000, scoped, tag = 'output window, operand 0, single buffered']
    %13 = vsyncpa [#allocation3], 0
    %14 = vsyncpa [#allocation6], 0
    %15 = vsyncpa [#allocation9], 0
    %16 = vsyncpa [#allocation4], 0
    // Predicated region
    $region2: #{tpu_custom_call.1} parent=1 // pred_check
      _
    $region3: #{tpu_custom_call.1} parent=1 // pred_check_branch
      %18 = sbr.rel (0) target = $region5
    $region4: #{tpu_custom_call.1} parent=1 // pred_region
      %s20 = ssub.s32 2048, 2048
      %21 = vsyncadd [#allocation3], %s20
      %s22 = sshll.u32 [#allocation2], 4
      %s23 = int_to_ptr.vmem [resolvable:$true] %s22
      %28 = dma.hbm_to_vmem [thread:$0]  %s0, 2048, %s23, [#allocation3], 128, 128, 8
    $region5: #{tpu_custom_call.1} parent=1 // pred_fallthru
      _
    // Predicated region
    $region6: #{tpu_custom_call.1} parent=1 // pred_check
      _
    $region7: #{tpu_custom_call.1} parent=1 // pred_check_branch
      %30 = sbr.rel (0) target = $region9
    $region8: #{tpu_custom_call.1} parent=1 // pred_region
      _
    $region9: #{tpu_custom_call.1} parent=1 // pred_fallthru
      _
    // Predicated region
    $region10: #{tpu_custom_call.1} parent=1 // pred_check
      _
    $region11: #{tpu_custom_call.1} parent=1 // pred_check_branch
      %32 = sbr.rel (0) target = $region13
    $region12: #{tpu_custom_call.1} parent=1 // pred_region
      %s34 = ssub.s32 2048, 2048
      %35 = vsyncadd [#allocation6], %s34
      %s36 = sshll.u32 [#allocation5], 4
      %s37 = int_to_ptr.vmem [resolvable:$true] %s36
      %42 = dma.hbm_to_vmem [thread:$0]  %s2, 2048, %s37, [#allocation6], 128, 128, 8
    $region13: #{tpu_custom_call.1} parent=1 // pred_fallthru
      _
    // Predicated region
    $region14: #{tpu_custom_call.1} parent=1 // pred_check
      _
    $region15: #{tpu_custom_call.1} parent=1 // pred_check_branch
      %44 = sbr.rel (0) target = $region17
    $region16: #{tpu_custom_call.1} parent=1 // pred_region
      _
    $region17: #{tpu_custom_call.1} parent=1 // pred_fallthru
      _
    // Predicated region
    $region18: #{tpu_custom_call.1} parent=1 // pred_check
      _
    $region19: #{tpu_custom_call.1} parent=1 // pred_check_branch
      %46 = sbr.rel (0) target = $region21
    $region20: #{tpu_custom_call.1} parent=1 // pred_region
      %s48 = ssub.s32 2048, 2048
      %49 = vsyncadd [#allocation6], %s48
      %s50 = sshll.u32 [#allocation7], 4
      %s51 = int_to_ptr.vmem [resolvable:$true] %s50
      %56 = dma.hbm_to_vmem [thread:$0]  %s4, 2048, %s51, [#allocation6], 128, 128, 8
    $region21: #{tpu_custom_call.1} parent=1 // pred_fallthru
      _
    // Predicated region
    $region22: #{tpu_custom_call.1} parent=1 // pred_check
      _
    $region23: #{tpu_custom_call.1} parent=1 // pred_check_branch
      %58 = sbr.rel (0) target = $region25
    $region24: #{tpu_custom_call.1} parent=1 // pred_region
      _
    $region25: #{tpu_custom_call.1} parent=1 // pred_fallthru
      _
    // Predicated region
    $region26: #{tpu_custom_call.1} parent=1 // pred_check
      _
    $region27: #{tpu_custom_call.1} parent=1 // pred_check_branch
      %60 = sbr.rel (0) target = $region29
    $region28: #{tpu_custom_call.1} parent=1 // pred_region
      %s62 = ssub.s32 2048, 2048
      %63 = vsyncadd [#allocation9], %s62
      %s64 = sshll.u32 [#allocation8], 4
      %s65 = int_to_ptr.vmem [resolvable:$true] %s64
      %70 = dma.hbm_to_vmem [thread:$0]  %s6, 2048, %s65, [#allocation9], 128, 128, 8
    $region29: #{tpu_custom_call.1} parent=1 // pred_fallthru
      _
    // Predicated region
    $region30: #{tpu_custom_call.1} parent=1 // pred_check
      _
    $region31: #{tpu_custom_call.1} parent=1 // pred_check_branch
      %72 = sbr.rel (0) target = $region33
    $region32: #{tpu_custom_call.1} parent=1 // pred_region
      _
    $region33: #{tpu_custom_call.1} parent=1 // pred_fallthru
      _
    // Predicated region
    $region34: #{tpu_custom_call.1} parent=1 // pred_check
      _
    $region35: #{tpu_custom_call.1} parent=1 // pred_check_branch
      %74 = sbr.rel (0) target = $region37
    $region36: #{tpu_custom_call.1} parent=1 // pred_region
      %75 = dma.done [#allocation3], 2048
    $region37: #{tpu_custom_call.1} parent=1 // pred_fallthru
      _
    // Predicated region
    $region38: #{tpu_custom_call.1} parent=1 // pred_check
      _
    $region39: #{tpu_custom_call.1} parent=1 // pred_check_branch
      %77 = sbr.rel (0) target = $region41
    $region40: #{tpu_custom_call.1} parent=1 // pred_region
      %78 = dma.done [#allocation6], 2048
    $region41: #{tpu_custom_call.1} parent=1 // pred_fallthru
      _
    // Predicated region
    $region42: #{tpu_custom_call.1} parent=1 // pred_check
      _
    $region43: #{tpu_custom_call.1} parent=1 // pred_check_branch
      %80 = sbr.rel (0) target = $region45
    $region44: #{tpu_custom_call.1} parent=1 // pred_region
      %81 = dma.done [#allocation6], 2048
    $region45: #{tpu_custom_call.1} parent=1 // pred_fallthru
      _
    // Predicated region
    $region46: #{tpu_custom_call.1} parent=1 // pred_check
      _
    $region47: #{tpu_custom_call.1} parent=1 // pred_check_branch
      %83 = sbr.rel (0) target = $region49
    $region48: #{tpu_custom_call.1} parent=1 // pred_region
      %84 = dma.done [#allocation9], 2048
    $region49: #{tpu_custom_call.1} parent=1 // pred_fallthru
      _
    %v85 = vld [vmem:[#allocation2] sm:$0xff]
    %v86 = vld [vmem:[#allocation2 + $0x8] sm:$0xff]
    %v87 = vld [vmem:[#allocation2 + $0x10] sm:$0xff]
    %v88 = vld [vmem:[#allocation2 + $0x18] sm:$0xff]
    %v89 = vld [vmem:[#allocation2 + $0x20] sm:$0xff]
    %v90 = vld [vmem:[#allocation2 + $0x28] sm:$0xff]
    %v91 = vld [vmem:[#allocation2 + $0x30] sm:$0xff]
    %v92 = vld [vmem:[#allocation2 + $0x38] sm:$0xff]
    %v93 = vld [vmem:[#allocation2 + $0x40] sm:$0xff]
    %v94 = vld [vmem:[#allocation2 + $0x48] sm:$0xff]
    %v95 = vld [vmem:[#allocation2 + $0x50] sm:$0xff]
    %v96 = vld [vmem:[#allocation2 + $0x58] sm:$0xff]
    %v97 = vld [vmem:[#allocation2 + $0x60] sm:$0xff]
    %v98 = vld [vmem:[#allocation2 + $0x68] sm:$0xff]
    %v99 = vld [vmem:[#allocation2 + $0x70] sm:$0xff]
    %v100 = vld [vmem:[#allocation2 + $0x78] sm:$0xff]
    %v101 = vadd.f32 %v85, %v86
    %v102 = vrot.slane %v101, 4
    %v103 = vadd.f32 %v101, %v102
    %v104 = vrot.slane %v103, 2
    %v105 = vadd.f32 %v103, %v104
    %v106 = vrot.slane %v105, 1
    %v107 = vadd.f32 %v105, %v106
    %v108 = vadd.f32 %v87, %v88
    %v109 = vrot.slane %v108, 4
    %v110 = vadd.f32 %v108, %v109
    %v111 = vrot.slane %v110, 2
    %v112 = vadd.f32 %v110, %v111
    %v113 = vrot.slane %v112, 1
    %v114 = vadd.f32 %v112, %v113
    %v115 = vadd.f32 %v89, %v90
    %v116 = vrot.slane %v115, 4
    %v117 = vadd.f32 %v115, %v116
    %v118 = vrot.slane %v117, 2
    %v119 = vadd.f32 %v117, %v118
    %v120 = vrot.slane %v119, 1
    %v121 = vadd.f32 %v119, %v120
    %v122 = vadd.f32 %v91, %v92
    %v123 = vrot.slane %v122, 4
    %v124 = vadd.f32 %v122, %v123
    %v125 = vrot.slane %v124, 2
    %v126 = vadd.f32 %v124, %v125
    %v127 = vrot.slane %v126, 1
    %v128 = vadd.f32 %v126, %v127
    %v129 = vadd.f32 %v93, %v94
    %v130 = vrot.slane %v129, 4
    %v131 = vadd.f32 %v129, %v130
    %v132 = vrot.slane %v131, 2
    %v133 = vadd.f32 %v131, %v132
    %v134 = vrot.slane %v133, 1
    %v135 = vadd.f32 %v133, %v134
    %v136 = vadd.f32 %v95, %v96
    %v137 = vrot.slane %v136, 4
    %v138 = vadd.f32 %v136, %v137
    %v139 = vrot.slane %v138, 2
    %v140 = vadd.f32 %v138, %v139
    %v141 = vrot.slane %v140, 1
    %v142 = vadd.f32 %v140, %v141
    %v143 = vadd.f32 %v97, %v98
    %v144 = vrot.slane %v143, 4
    %v145 = vadd.f32 %v143, %v144
    %v146 = vrot.slane %v145, 2
    %v147 = vadd.f32 %v145, %v146
    %v148 = vrot.slane %v147, 1
    %v149 = vadd.f32 %v147, %v148
    %v150 = vadd.f32 %v99, %v100
    %v151 = vrot.slane %v150, 4
    %v152 = vadd.f32 %v150, %v151
    %v153 = vrot.slane %v152, 2
    %v154 = vadd.f32 %v152, %v153
    %v155 = vrot.slane %v154, 1
    %v156 = vadd.f32 %v154, %v155
    %v157 = vld [vmem:[%s1] sm:$0xff]
    %v158 = vrcp.pop %v157
    %160 = vset.pattern.permute.xlu0 0
    %161 = vperm.xlu0 %160, %v158
    %v162 = vpop.permute.xlu0 %161
    %v163 = vrot.slane %v162, 1
    %v164 = vrot.slane %v162, 2
    %v165 = vrot.slane %v162, 3
    %v166 = vrot.slane %v162, 4
    %v167 = vrot.slane %v162, 5
    %v168 = vrot.slane %v162, 6
    %v169 = vrot.slane %v162, 7
    %v178 = vmul.f32 %v107, %v162
    %v179 = vmul.f32 %v114, %v163
    %v180 = vmul.f32 %v121, %v164
    %v181 = vmul.f32 %v128, %v165
    %v182 = vmul.f32 %v135, %v166
    %v183 = vmul.f32 %v142, %v167
    %v184 = vmul.f32 %v149, %v168
    %v185 = vmul.f32 %v156, %v169
    %v186 = vmax.f32 %v178, 0.0
    %v187 = vmax.f32 %v179, 0.0
    %v188 = vmax.f32 %v180, 0.0
    %v189 = vmax.f32 %v181, 0.0
    %v190 = vmax.f32 %v182, 0.0
    %v191 = vmax.f32 %v183, 0.0
    %v192 = vmax.f32 %v184, 0.0
    %v193 = vmax.f32 %v185, 0.0
    %v194 = vld [vmem:[%s3] sm:$0x1]
    %v195 = vld [vmem:[#allocation5] sm:$0xff]
    %v196 = vld [vmem:[#allocation5 + $0x8] sm:$0xff]
    %v197 = vld [vmem:[#allocation5 + $0x10] sm:$0xff]
    %v198 = vld [vmem:[#allocation5 + $0x18] sm:$0xff]
    %v199 = vld [vmem:[#allocation5 + $0x20] sm:$0xff]
    %v200 = vld [vmem:[#allocation5 + $0x28] sm:$0xff]
    %v201 = vld [vmem:[#allocation5 + $0x30] sm:$0xff]
    %v202 = vld [vmem:[#allocation5 + $0x38] sm:$0xff]
    %v203 = vld [vmem:[#allocation5 + $0x40] sm:$0xff]
    %v204 = vld [vmem:[#allocation5 + $0x48] sm:$0xff]
    %v205 = vld [vmem:[#allocation5 + $0x50] sm:$0xff]
    %v206 = vld [vmem:[#allocation5 + $0x58] sm:$0xff]
    %v207 = vld [vmem:[#allocation5 + $0x60] sm:$0xff]
    %v208 = vld [vmem:[#allocation5 + $0x68] sm:$0xff]
    %v209 = vld [vmem:[#allocation5 + $0x70] sm:$0xff]
    %v210 = vld [vmem:[#allocation5 + $0x78] sm:$0xff]
    %v212 = vlaneseq
    %v213 = vshrl.u32 %v212, 7
    %v214 = vsub.s32 0, %v213
    %v215 = vrot.slane %v194, %v214
    %v225 = vrot.slane %v187, 7
    %vm226 = vcmask 1041409
    %v227 = vsel %vm226, %v225, %v186
    %v228 = vrot.slane %v188, 6
    %vm229 = vcmask 1042434
    %v230 = vsel %vm229, %v228, %v227
    %v231 = vrot.slane %v189, 5
    %vm232 = vcmask 1043459
    %v233 = vsel %vm232, %v231, %v230
    %v234 = vrot.slane %v190, 4
    %vm235 = vcmask 1044484
    %v236 = vsel %vm235, %v234, %v233
    %v237 = vrot.slane %v191, 3
    %vm238 = vcmask 1045509
    %v239 = vsel %vm238, %v237, %v236
    %v240 = vrot.slane %v192, 2
    %vm241 = vcmask 1046534
    %v242 = vsel %vm241, %v240, %v239
    %v243 = vrot.slane %v193, 1
    %vm244 = vcmask 1047559
    %v245 = vsel %vm244, %v243, %v242
    %247 = vmatprep.subr.mxu0 0.0
    %248 = vmatpush1.msra.mxu0 %v195
    %249 = vmatprep.subr.mxu0 0.0
    %250 = vmatpush1.msra.mxu0 %v196
    %251 = vmatprep.subr.mxu0 0.0
    %252 = vmatpush1.msra.mxu0 %v197
    %253 = vmatprep.subr.mxu0 0.0
    %254 = vmatpush1.msra.mxu0 %v198
    %255 = vmatprep.subr.mxu0 0.0
    %256 = vmatpush1.msra.mxu0 %v199
    %257 = vmatprep.subr.mxu0 0.0
    %258 = vmatpush1.msra.mxu0 %v200
    %259 = vmatprep.subr.mxu0 0.0
    %260 = vmatpush1.msra.mxu0 %v201
    %261 = vmatprep.subr.mxu0 0.0
    %262 = vmatpush1.msra.mxu0 %v202
    %263 = vmatprep.subr.mxu0 0.0
    %264 = vmatpush1.msra.mxu0 %v203
    %265 = vmatprep.subr.mxu0 0.0
    %266 = vmatpush1.msra.mxu0 %v204
    %267 = vmatprep.subr.mxu0 0.0
    %268 = vmatpush1.msra.mxu0 %v205
    %269 = vmatprep.subr.mxu0 0.0
    %270 = vmatpush1.msra.mxu0 %v206
    %271 = vmatprep.subr.mxu0 0.0
    %272 = vmatpush1.msra.mxu0 %v207
    %273 = vmatprep.subr.mxu0 0.0
    %274 = vmatpush1.msra.mxu0 %v208
    %275 = vmatprep.subr.mxu0 0.0
    %276 = vmatpush1.msra.mxu0 %v209
    %277 = vmatprep.subr.mxu0 0.0
    %278 = vmatpush1.msra.mxu0 %v210
    %279 = vmatprep.subr.mxu0 0.0
    %280 = vmatpush1.msra.mxu0 0.0
    %281 = vmatprep.subr.mxu0 0.0
    %282 = vmatpush1.msra.mxu0 0.0
    %283 = vmatprep.subr.mxu0 0.0
    %284 = vmatpush1.msra.mxu0 0.0
    %285 = vmatprep.subr.mxu0 0.0
    %286 = vmatpush1.msra.mxu0 0.0
    %287 = vmatprep.subr.mxu0 0.0
    %288 = vmatpush1.msra.mxu0 0.0
    %289 = vmatprep.subr.mxu0 0.0
    %290 = vmatpush1.msra.mxu0 0.0
    %291 = vmatprep.subr.mxu0 0.0
    %292 = vmatpush1.msra.mxu0 0.0
    %293 = vmatprep.subr.mxu0 0.0
    %294 = vmatpush1.msra.mxu0 0.0
    %295 = vmatprep.subr.mxu0 0.0
    %296 = vmatpush1.msra.mxu0 0.0
    %297 = vmatprep.subr.mxu0 0.0
    %298 = vmatpush1.msra.mxu0 0.0
    %299 = vmatprep.subr.mxu0 0.0
    %300 = vmatpush1.msra.mxu0 0.0
    %301 = vmatprep.subr.mxu0 0.0
    %302 = vmatpush1.msra.mxu0 0.0
    %303 = vmatprep.subr.mxu0 0.0
    %304 = vmatpush1.msra.mxu0 0.0
    %305 = vmatprep.subr.mxu0 0.0
    %306 = vmatpush1.msra.mxu0 0.0
    %307 = vmatprep.subr.mxu0 0.0
    %308 = vmatpush1.msra.mxu0 0.0
    %309 = vmatprep.subr.mxu0 0.0
    %310 = vmatpush1.msra.mxu0 0.0
    %311 = vmatprep.mubr.f32.mxu0 0.0
    %312 = vmatmul.mubr.f32.gmra.mrb[0].mxu0 %v245
    %v313 = vpop.f32.mrb[0].mxu0
    %v314 = vadd.f32 %v215, %v313
    %v315 = vpop.f32.mrb[0].mxu0
    %316 = vdwg.mxu0
    %v317 = vmax.f32 %v314, 0.0
    %v318 = vld [vmem:[%s5] sm:$0x1]
    %v319 = vld [vmem:[#allocation7] sm:$0xff]
    %v320 = vld [vmem:[#allocation7 + $0x8] sm:$0xff]
    %v321 = vld [vmem:[#allocation7 + $0x10] sm:$0xff]
    %v322 = vld [vmem:[#allocation7 + $0x18] sm:$0xff]
    %v323 = vld [vmem:[#allocation7 + $0x20] sm:$0xff]
    %v324 = vld [vmem:[#allocation7 + $0x28] sm:$0xff]
    %v325 = vld [vmem:[#allocation7 + $0x30] sm:$0xff]
    %v326 = vld [vmem:[#allocation7 + $0x38] sm:$0xff]
    %v327 = vld [vmem:[#allocation7 + $0x40] sm:$0xff]
    %v328 = vld [vmem:[#allocation7 + $0x48] sm:$0xff]
    %v329 = vld [vmem:[#allocation7 + $0x50] sm:$0xff]
    %v330 = vld [vmem:[#allocation7 + $0x58] sm:$0xff]
    %v331 = vld [vmem:[#allocation7 + $0x60] sm:$0xff]
    %v332 = vld [vmem:[#allocation7 + $0x68] sm:$0xff]
    %v333 = vld [vmem:[#allocation7 + $0x70] sm:$0xff]
    %v334 = vld [vmem:[#allocation7 + $0x78] sm:$0xff]
    %v336 = vlaneseq
    %v337 = vshrl.u32 %v336, 7
    %v338 = vsub.s32 0, %v337
    %v339 = vrot.slane %v318, %v338
    %341 = vmatprep.subr.mxu0 0.0
    %342 = vmatpush1.msra.mxu0 %v319
    %343 = vmatprep.subr.mxu0 0.0
    %344 = vmatpush1.msra.mxu0 %v320
    %345 = vmatprep.subr.mxu0 0.0
    %346 = vmatpush1.msra.mxu0 %v321
    %347 = vmatprep.subr.mxu0 0.0
    %348 = vmatpush1.msra.mxu0 %v322
    %349 = vmatprep.subr.mxu0 0.0
    %350 = vmatpush1.msra.mxu0 %v323
    %351 = vmatprep.subr.mxu0 0.0
    %352 = vmatpush1.msra.mxu0 %v324
    %353 = vmatprep.subr.mxu0 0.0
    %354 = vmatpush1.msra.mxu0 %v325
    %355 = vmatprep.subr.mxu0 0.0
    %356 = vmatpush1.msra.mxu0 %v326
    %357 = vmatprep.subr.mxu0 0.0
    %358 = vmatpush1.msra.mxu0 %v327
    %359 = vmatprep.subr.mxu0 0.0
    %360 = vmatpush1.msra.mxu0 %v328
    %361 = vmatprep.subr.mxu0 0.0
    %362 = vmatpush1.msra.mxu0 %v329
    %363 = vmatprep.subr.mxu0 0.0
    %364 = vmatpush1.msra.mxu0 %v330
    %365 = vmatprep.subr.mxu0 0.0
    %366 = vmatpush1.msra.mxu0 %v331
    %367 = vmatprep.subr.mxu0 0.0
    %368 = vmatpush1.msra.mxu0 %v332
    %369 = vmatprep.subr.mxu0 0.0
    %370 = vmatpush1.msra.mxu0 %v333
    %371 = vmatprep.subr.mxu0 0.0
    %372 = vmatpush1.msra.mxu0 %v334
    %373 = vmatprep.subr.mxu0 0.0
    %374 = vmatpush1.msra.mxu0 0.0
    %375 = vmatprep.subr.mxu0 0.0
    %376 = vmatpush1.msra.mxu0 0.0
    %377 = vmatprep.subr.mxu0 0.0
    %378 = vmatpush1.msra.mxu0 0.0
    %379 = vmatprep.subr.mxu0 0.0
    %380 = vmatpush1.msra.mxu0 0.0
    %381 = vmatprep.subr.mxu0 0.0
    %382 = vmatpush1.msra.mxu0 0.0
    %383 = vmatprep.subr.mxu0 0.0
    %384 = vmatpush1.msra.mxu0 0.0
    %385 = vmatprep.subr.mxu0 0.0
    %386 = vmatpush1.msra.mxu0 0.0
    %387 = vmatprep.subr.mxu0 0.0
    %388 = vmatpush1.msra.mxu0 0.0
    %389 = vmatprep.subr.mxu0 0.0
    %390 = vmatpush1.msra.mxu0 0.0
    %391 = vmatprep.subr.mxu0 0.0
    %392 = vmatpush1.msra.mxu0 0.0
    %393 = vmatprep.subr.mxu0 0.0
    %394 = vmatpush1.msra.mxu0 0.0
    %395 = vmatprep.subr.mxu0 0.0
    %396 = vmatpush1.msra.mxu0 0.0
    %397 = vmatprep.subr.mxu0 0.0
    %398 = vmatpush1.msra.mxu0 0.0
    %399 = vmatprep.subr.mxu0 0.0
    %400 = vmatpush1.msra.mxu0 0.0
    %401 = vmatprep.subr.mxu0 0.0
    %402 = vmatpush1.msra.mxu0 0.0
    %403 = vmatprep.subr.mxu0 0.0
    %404 = vmatpush1.msra.mxu0 0.0
    %405 = vmatprep.mubr.f32.mxu0 0.0
    %406 = vmatmul.mubr.f32.gmra.mrb[0].mxu0 %v317
    %v407 = vpop.f32.mrb[0].mxu0
    %v408 = vadd.f32 %v339, %v407
    %v409 = vpop.f32.mrb[0].mxu0
    %410 = vdwg.mxu0
    %v411 = vmax.f32 %v408, 0.0
    %v412 = vld [vmem:[#allocation8] sm:$0xff]
    %v413 = vld [vmem:[#allocation8 + $0x8] sm:$0xff]
    %v414 = vld [vmem:[#allocation8 + $0x10] sm:$0xff]
    %v415 = vld [vmem:[#allocation8 + $0x18] sm:$0xff]
    %v416 = vld [vmem:[#allocation8 + $0x20] sm:$0xff]
    %v417 = vld [vmem:[#allocation8 + $0x28] sm:$0xff]
    %v418 = vld [vmem:[#allocation8 + $0x30] sm:$0xff]
    %v419 = vld [vmem:[#allocation8 + $0x38] sm:$0xff]
    %v420 = vld [vmem:[#allocation8 + $0x40] sm:$0xff]
    %v421 = vld [vmem:[#allocation8 + $0x48] sm:$0xff]
    %v422 = vld [vmem:[#allocation8 + $0x50] sm:$0xff]
    %v423 = vld [vmem:[#allocation8 + $0x58] sm:$0xff]
    %v424 = vld [vmem:[#allocation8 + $0x60] sm:$0xff]
    %v425 = vld [vmem:[#allocation8 + $0x68] sm:$0xff]
    %v426 = vld [vmem:[#allocation8 + $0x70] sm:$0xff]
    %v427 = vld [vmem:[#allocation8 + $0x78] sm:$0xff]
    %v428 = vld [vmem:[%s7] sm:$0x1]
    %v430 = vlaneseq
    %v431 = vshrl.u32 %v430, 7
    %v432 = vsub.s32 0, %v431
    %v433 = vrot.slane %v428, %v432
    %435 = vmatprep.subr.mxu0 0.0
    %436 = vmatpush1.msra.mxu0 %v412
    %437 = vmatprep.subr.mxu0 0.0
    %438 = vmatpush1.msra.mxu0 %v413
    %439 = vmatprep.subr.mxu0 0.0
    %440 = vmatpush1.msra.mxu0 %v414
    %441 = vmatprep.subr.mxu0 0.0
    %442 = vmatpush1.msra.mxu0 %v415
    %443 = vmatprep.subr.mxu0 0.0
    %444 = vmatpush1.msra.mxu0 %v416
    %445 = vmatprep.subr.mxu0 0.0
    %446 = vmatpush1.msra.mxu0 %v417
    %447 = vmatprep.subr.mxu0 0.0
    %448 = vmatpush1.msra.mxu0 %v418
    %449 = vmatprep.subr.mxu0 0.0
    %450 = vmatpush1.msra.mxu0 %v419
    %451 = vmatprep.subr.mxu0 0.0
    %452 = vmatpush1.msra.mxu0 %v420
    %453 = vmatprep.subr.mxu0 0.0
    %454 = vmatpush1.msra.mxu0 %v421
    %455 = vmatprep.subr.mxu0 0.0
    %456 = vmatpush1.msra.mxu0 %v422
    %457 = vmatprep.subr.mxu0 0.0
    %458 = vmatpush1.msra.mxu0 %v423
    %459 = vmatprep.subr.mxu0 0.0
    %460 = vmatpush1.msra.mxu0 %v424
    %461 = vmatprep.subr.mxu0 0.0
    %462 = vmatpush1.msra.mxu0 %v425
    %463 = vmatprep.subr.mxu0 0.0
    %464 = vmatpush1.msra.mxu0 %v426
    %465 = vmatprep.subr.mxu0 0.0
    %466 = vmatpush1.msra.mxu0 %v427
    %467 = vmatprep.subr.mxu0 0.0
    %468 = vmatpush1.msra.mxu0 0.0
    %469 = vmatprep.subr.mxu0 0.0
    %470 = vmatpush1.msra.mxu0 0.0
    %471 = vmatprep.subr.mxu0 0.0
    %472 = vmatpush1.msra.mxu0 0.0
    %473 = vmatprep.subr.mxu0 0.0
    %474 = vmatpush1.msra.mxu0 0.0
    %475 = vmatprep.subr.mxu0 0.0
    %476 = vmatpush1.msra.mxu0 0.0
    %477 = vmatprep.subr.mxu0 0.0
    %478 = vmatpush1.msra.mxu0 0.0
    %479 = vmatprep.subr.mxu0 0.0
    %480 = vmatpush1.msra.mxu0 0.0
    %481 = vmatprep.subr.mxu0 0.0
    %482 = vmatpush1.msra.mxu0 0.0
    %483 = vmatprep.subr.mxu0 0.0
    %484 = vmatpush1.msra.mxu0 0.0
    %485 = vmatprep.subr.mxu0 0.0
    %486 = vmatpush1.msra.mxu0 0.0
    %487 = vmatprep.subr.mxu0 0.0
    %488 = vmatpush1.msra.mxu0 0.0
    %489 = vmatprep.subr.mxu0 0.0
    %490 = vmatpush1.msra.mxu0 0.0
    %491 = vmatprep.subr.mxu0 0.0
    %492 = vmatpush1.msra.mxu0 0.0
    %493 = vmatprep.subr.mxu0 0.0
    %494 = vmatpush1.msra.mxu0 0.0
    %495 = vmatprep.subr.mxu0 0.0
    %496 = vmatpush1.msra.mxu0 0.0
    %497 = vmatprep.subr.mxu0 0.0
    %498 = vmatpush1.msra.mxu0 0.0
    %499 = vmatprep.mubr.f32.mxu0 0.0
    %500 = vmatmul.mubr.f32.gmra.mrb[0].mxu0 %v411
    %v501 = vpop.f32.mrb[0].mxu0
    %v502 = vadd.f32 %v433, %v501
    %v503 = vpop.f32.mrb[0].mxu0
    %504 = vdwg.mxu0
    %505 = vst [vmem:[#allocation10] sm:$0xff] %v502
    // Predicated region
    $region50: #{tpu_custom_call.1} parent=1 // pred_check
      _
    $region51: #{tpu_custom_call.1} parent=1 // pred_check_branch
      %507 = sbr.rel (0) target = $region53
    $region52: #{tpu_custom_call.1} parent=1 // pred_region
      %s509 = ssub.s32 128, 128
      %510 = vsyncadd [#allocation4], %s509
      %s512 = sshll.u32 [#allocation10], 4
      %s513 = int_to_ptr.vmem [resolvable:$true] %s512
      %515 = dma.vmem_to_hbm [thread:$0]  %s513, 128, %s8, [#allocation4]
    $region53: #{tpu_custom_call.1} parent=1 // pred_fallthru
      _
    // Predicated region
    $region54: #{tpu_custom_call.1} parent=1 // pred_check
      _
    $region55: #{tpu_custom_call.1} parent=1 // pred_check_branch
      %517 = sbr.rel (0) target = $region57
    $region56: #{tpu_custom_call.1} parent=1 // pred_region
      %518 = dma.done [#allocation4], 128
    $region57: #{tpu_custom_call.1} parent=1 // pred_fallthru
      _
    %519 = vsyncpa [#allocation3], 1
    %520 = vsyncpa [#allocation6], 1
    %521 = vsyncpa [#allocation9], 1
    %522 = vsyncpa [#allocation4], 1

</llo_original>
